<compile_context>
chip_gen: v7x
topology: tpu7x:2x2x1
jax: 0.10.0
libtpu: 0.0.40
codegen_flags: <defaults>
</compile_context>

<pallas_src>
import math

import jax
import jax.numpy as jnp
from jax import lax
from jax.experimental import pallas as pl
from jax.experimental.pallas import tpu as pltpu


VMEM_LIMIT = 64 * 1024 * 1024  # fits v7x physical; well above v5e's 16 MiB default scoped limit


# ---------------------------------------------------------------------------
# Stage 1: fused per-head Q/K/V projections, head-major output
# ---------------------------------------------------------------------------
def qkv_proj_kernel(xq_ref, xk_ref, xv_ref,
                    wq_ref, bq_ref, wk_ref, bk_ref, wv_ref, bv_ref,
                    qo_ref, ko_ref, vo_ref):
    # x*_ref: (tr, D) row tile of the current batch element (input dtype).
    # w*_ref: (D, dh) bf16 per-head weight block; b*_ref: (1, dh) f32.
    # *o_ref: (tr, dh) bf16 head-major output tile.
    xq = xq_ref[...].astype(jnp.bfloat16)
    xk = xk_ref[...].astype(jnp.bfloat16)
    xv = xv_ref[...].astype(jnp.bfloat16)
    # bf16 operands -> MXU, f32 accumulation; f32 bias added post-accumulation.
    # (1/sqrt(dh) is already folded into wq/bq host-side.)
    qo = jnp.dot(xq, wq_ref[...], preferred_element_type=jnp.float32) + bq_ref[...]
    ko = jnp.dot(xk, wk_ref[...], preferred_element_type=jnp.float32) + bk_ref[...]
    vo = jnp.dot(xv, wv_ref[...], preferred_element_type=jnp.float32) + bv_ref[...]
    qo_ref[...] = qo.astype(qo_ref.dtype)
    ko_ref[...] = ko.astype(ko_ref.dtype)
    vo_ref[...] = vo.astype(vo_ref.dtype)


# ---------------------------------------------------------------------------
# Stage 2: flash-style multi-head attention + folded output projection
# ---------------------------------------------------------------------------
def flash_attn_kernel(q_ref, k_ref, v_ref, wo_ref, bo_ref, o_ref,
                      m_scr, l_scr, acc_scr):
    # q_ref: (H, tq, dh) bf16, already scaled by 1/sqrt(dh)
    # k_ref, v_ref: (H, tk, dh) bf16
    # wo_ref: (H, dh, D) bf16; bo_ref: (1, D) f32; o_ref: (tq, D)
    kv = pl.program_id(2)

    @pl.when(kv == 0)
    def _():
        m_scr[...] = jnp.full_like(m_scr, -jnp.inf)
        l_scr[...] = jnp.zeros_like(l_scr)
        acc_scr[...] = jnp.zeros_like(acc_scr)

    q = q_ref[...]
    k = k_ref[...]
    v = v_ref[...]

    # Scores (H, tq, tk): heads batched, contraction over d_head, bf16 operands
    # into the MXU with f32 accumulation, no explicit K transpose materialized.
    s = lax.dot_general(q, k,
                        dimension_numbers=(((2,), (2,)), ((0,), (0,))),
                        preferred_element_type=jnp.float32)
    # TODO(synk): optional attention mask (masked_fill) not wired through; the
    # reference module defaults to mask=None.

    m_prev = m_scr[...]
    m_new = jnp.maximum(m_prev, jnp.max(s, axis=-1, keepdims=True))   # (H, tq, 1)
    alpha = jnp.exp(m_prev - m_new)
    p = jnp.exp(s - m_new)                                            # (H, tq, tk) f32
    l_scr[...] = alpha * l_scr[...] + jnp.sum(p, axis=-1, keepdims=True)

    # (H, tq, tk) x (H, tk, dh) -> (H, tq, dh); probs cast to bf16 for the MXU.
    pv = lax.dot_general(p.astype(jnp.bfloat16), v,
                         dimension_numbers=(((2,), (1,)), ((0,), (0,))),
                         preferred_element_type=jnp.float32)
    acc_scr[...] = alpha * acc_scr[...] + pv
    m_scr[...] = m_new

    @pl.when(kv == pl.num_programs(2) - 1)
    def _():
        # EUP reciprocal (separate issue slot); exact variant for tighter parity.
        ctx = acc_scr[...] * pl.reciprocal(l_scr[...], approx=False)  # (H, tq, dh)
        # Output projection folded per head: sum_h ctx_h @ Wo_rows[h]
        # (== concat(ctx_heads) @ Wo, without the lane-axis concat).
        oh = lax.dot_general(ctx.astype(jnp.bfloat16), wo_ref[...],
                             dimension_numbers=(((2,), (1,)), ((0,), (0,))),
                             preferred_element_type=jnp.float32)      # (H, tq, D)
        out = jnp.sum(oh, axis=0) + bo_ref[...]                       # (tq, D)
        o_ref[...] = out.astype(o_ref.dtype)


# ---------------------------------------------------------------------------
# Wrapper
# ---------------------------------------------------------------------------
def msa_forward(q, k, v, kparams, *, num_heads: int,
                row_tile=None, q_tile=None, kv_tile=None):
    """q, k, v: (B, S, D).  kparams: output of prepare_params() (head-major,
    bf16 weights, scale pre-folded into wq/bq)."""
    B, S, D = q.shape
    assert D % num_heads == 0
    dh = D // num_heads
    H = num_heads

    def pick(t, default=256):
        # 256 matches the v6e/v7x 256-wide MXU; clamp to S for small problems.
        t = min(S, default) if t is None else t
        assert S % t == 0, "seq_len must be divisible by the tile size"
        return t

    tr, tq, tk = pick(row_tile), pick(q_tile), pick(kv_tile)

    # ---- Stage 1: per-head projections, head-major (B, H, S, dh) outputs ----
    x_spec = pl.BlockSpec((None, tr, D), lambda b, i, h: (b, i, 0))      # resident over h
    w_spec = pl.BlockSpec((None, D, dh), lambda b, i, h: (h, 0, 0))      # (D, dh) per head
    b_spec = pl.BlockSpec((None, 1, dh), lambda b, i, h: (h, 0, 0))
    hm_out_spec = pl.BlockSpec((None, None, tr, dh), lambda b, i, h: (b, h, i, 0))

    qh, kh, vh = pl.pallas_call(
        qkv_proj_kernel,
        out_shape=(jax.ShapeDtypeStruct((B, H, S, dh), jnp.bfloat16),) * 3,
        grid_spec=pltpu.PrefetchScalarGridSpec(
            num_scalar_prefetch=0,
            grid=(B, S // tr, H),
            in_specs=[x_spec, x_spec, x_spec,
                      w_spec, b_spec, w_spec, b_spec, w_spec, b_spec],
            out_specs=(hm_out_spec, hm_out_spec, hm_out_spec),
        ),
        compiler_params=pltpu.CompilerParams(
            dimension_semantics=("parallel", "parallel", "arbitrary"),
            vmem_limit_bytes=VMEM_LIMIT),
    )(q, k, v,
      kparams["wq"], kparams["bq"], kparams["wk"], kparams["bk"],
      kparams["wv"], kparams["bv"])

    # ---- Stage 2: flash attention + output projection ----------------------
    q_spec = pl.BlockSpec((None, H, tq, dh), lambda b, qi, ki: (b, 0, qi, 0))
    kv_spec = pl.BlockSpec((None, H, tk, dh), lambda b, qi, ki: (b, 0, ki, 0))

    out = pl.pallas_call(
        flash_attn_kernel,
        out_shape=jax.ShapeDtypeStruct((B, S, D), q.dtype),
        grid_spec=pltpu.PrefetchScalarGridSpec(
            num_scalar_prefetch=0,
            grid=(B, S // tq, S // tk),
            in_specs=[
                q_spec, kv_spec, kv_spec,
                # Constant index_maps -> fetched once, kept resident.
                pl.BlockSpec((H, dh, D), lambda b, qi, ki: (0, 0, 0)),
                pl.BlockSpec((1, D), lambda b, qi, ki: (0, 0)),
            ],
            out_specs=pl.BlockSpec((None, tq, D), lambda b, qi, ki: (b, qi, 0)),
            scratch_shapes=[
                pltpu.VMEM((H, tq, 1), jnp.float32),   # running max
                pltpu.VMEM((H, tq, 1), jnp.float32),   # running denom
                pltpu.VMEM((H, tq, dh), jnp.float32),  # output accumulator
            ],
        ),
        compiler_params=pltpu.CompilerParams(
            dimension_semantics=("parallel", "parallel", "arbitrary"),
            vmem_limit_bytes=VMEM_LIMIT),
    )(qh, kh, vh, kparams["wo"], kparams["bo"])
    return out


# ---------------------------------------------------------------------------
# Params, one-time kernel-layout transform, and pure-JAX reference
# ---------------------------------------------------------------------------
def init_params(key, d_model):
    """Weights: xavier_uniform (as the torch module), pre-transposed to
    (in, out); biases: uniform(-1/sqrt(d_model), 1/sqrt(d_model)) like torch."""
    keys = jax.random.split(key, 8)
    xav = math.sqrt(6.0 / (d_model + d_model))
    bnd = 1.0 / math.sqrt(d_model)

    def w(kk):
        return jax.random.uniform(kk, (d_model, d_model), jnp.float32, -xav, xav).T

    def b(kk):
        return jax.random.uniform(kk, (1, d_model), jnp.float32, -bnd, bnd)

    return {
        "wq": w(keys[0]), "bq": b(keys[1]),
        "wk": w(keys[2]), "bk": b(keys[3]),
        "wv": w(keys[4]), "bv": b(keys[5]),
        "wo": w(keys[6]), "bo": b(keys[7]),
    }


def prepare_params(params, num_heads: int):
    """One-time host-side transform: fold 1/sqrt(d_head) into Wq/bq, reshape
    weights to head-major kernel layout, cast weights to bf16 (biases stay f32
    for post-accumulation adds)."""
    D = params["wq"].shape[0]
    dh = D // num_heads
    scale = 1.0 / math.sqrt(dh)

    def head_w(w):   # (D_in, D_out) -> (H, D_in, dh)
        return jnp.transpose(w.reshape(D, num_heads, dh), (1, 0, 2)).astype(jnp.bfloat16)

    def head_b(b):   # (1, D_out) -> (H, 1, dh)
        return jnp.transpose(b.reshape(1, num_heads, dh), (1, 0, 2)).astype(jnp.float32)

    return {
        "wq": head_w(params["wq"] * scale), "bq": head_b(params["bq"] * scale),
        "wk": head_w(params["wk"]),         "bk": head_b(params["bk"]),
        "wv": head_w(params["wv"]),         "bv": head_b(params["bv"]),
        "wo": params["wo"].reshape(num_heads, dh, D).astype(jnp.bfloat16),
        "bo": params["bo"].astype(jnp.float32),
    }


def msa_reference(q, k, v, params, *, num_heads: int):
    """Plain-JAX f32 reference mirroring the PyTorch forward, for validation."""
    B, S, D = q.shape
    dh = D // num_heads

    def proj(x, w, b):
        return x @ w + b

    def split(x):
        return x.reshape(B, S, num_heads, dh).transpose(0, 2, 1, 3)

    Q = split(proj(q, params["wq"], params["bq"]))
    K = split(proj(k, params["wk"], params["bk"]))
    V = split(proj(v, params["wv"], params["bv"]))

    score = jnp.einsum("bhqd,bhkd->bhqk", Q, K) / math.sqrt(dh)
    score = jax.nn.softmax(score, axis=-1)
    out = jnp.einsum("bhqk,bhkd->bhqd", score, V)
    out = out.transpose(0, 2, 1, 3).reshape(B, S, D)
    return proj(out, params["wo"], params["bo"])


if __name__ == "__main__":
    B, S, D, H = 2, 8, 32, 4

    key = jax.random.PRNGKey(0)
    kq, kk, kv_, kp = jax.random.split(key, 4)
    q = jax.random.normal(kq, (B, S, D), jnp.float32)
    k = jax.random.normal(kk, (B, S, D), jnp.float32)
    v = jax.random.normal(kv_, (B, S, D), jnp.float32)
    params = init_params(kp, D)
    kparams = prepare_params(params, H)   # one-time host transform

    out = msa_forward(q, k, v, kparams, num_heads=H)
    out = jax.block_until_ready(out)

    ref = msa_reference(q, k, v, params, num_heads=H)
    assert out.shape == (B, S, D)
    # Tolerance accounts for bf16 MXU operands / bf16 Q-K-V intermediates vs
    # the f32 reference (deliberate perf/accuracy tradeoff).
    assert jnp.allclose(out, ref, atol=5e-2, rtol=5e-2), (
        f"mismatch vs reference, max abs err = {jnp.max(jnp.abs(out - ref))}")

    print("KERNEL_OK")
</pallas_src>

<mosaic_0001>
module attributes {stable_mosaic.version = 11 : i64} {
  func.func @qkv_proj_kernel(%arg0: i32, %arg1: i32, %arg2: i32, %arg3: memref<1x8x32xf32, #tpu.memory_space<vmem>>, %arg4: memref<1x8x32xf32, #tpu.memory_space<vmem>>, %arg5: memref<1x8x32xf32, #tpu.memory_space<vmem>>, %arg6: memref<1x32x8xbf16, #tpu.memory_space<vmem>>, %arg7: memref<1x1x8xf32, #tpu.memory_space<vmem>>, %arg8: memref<1x32x8xbf16, #tpu.memory_space<vmem>>, %arg9: memref<1x1x8xf32, #tpu.memory_space<vmem>>, %arg10: memref<1x32x8xbf16, #tpu.memory_space<vmem>>, %arg11: memref<1x1x8xf32, #tpu.memory_space<vmem>>, %arg12: memref<1x1x8x8xbf16, #tpu.memory_space<vmem>>, %arg13: memref<1x1x8x8xbf16, #tpu.memory_space<vmem>>, %arg14: memref<1x1x8x8xbf16, #tpu.memory_space<vmem>>) attributes {dimension_semantics = [#tpu.dimension_semantics<parallel>, #tpu.dimension_semantics<parallel>, #tpu.dimension_semantics<arbitrary>], iteration_bounds = array<i64: 2, 1, 4>, scalar_prefetch = 0 : i64, scratch_operands = 0 : i64, tpu.core_type = #tpu.core_type<tc>, window_params = [{transform_indices = @transform_0, window_bounds = array<i64: 1, 8, 32>}, {transform_indices = @transform_1, window_bounds = array<i64: 1, 8, 32>}, {transform_indices = @transform_2, window_bounds = array<i64: 1, 8, 32>}, {transform_indices = @transform_3, window_bounds = array<i64: 1, 32, 8>}, {transform_indices = @transform_4, window_bounds = array<i64: 1, 1, 8>}, {transform_indices = @transform_5, window_bounds = array<i64: 1, 32, 8>}, {transform_indices = @transform_6, window_bounds = array<i64: 1, 1, 8>}, {transform_indices = @transform_7, window_bounds = array<i64: 1, 32, 8>}, {transform_indices = @transform_8, window_bounds = array<i64: 1, 1, 8>}, {transform_indices = @transform_9, window_bounds = array<i64: 1, 1, 8, 8>}, {transform_indices = @transform_10, window_bounds = array<i64: 1, 1, 8, 8>}, {transform_indices = @transform_11, window_bounds = array<i64: 1, 1, 8, 8>}]} {
    %c0 = arith.constant 0 : index
    %c0_0 = arith.constant 0 : index
    %c0_1 = arith.constant 0 : index
    %0 = vector.load %arg3[%c0, %c0_0, %c0_1] : memref<1x8x32xf32, #tpu.memory_space<vmem>>, vector<1x8x32xf32>
    %1 = vector.shape_cast %0 : vector<1x8x32xf32> to vector<8x32xf32>
    %2 = arith.truncf %1 : vector<8x32xf32> to vector<8x32xbf16>
    %c0_2 = arith.constant 0 : index
    %c0_3 = arith.constant 0 : index
    %c0_4 = arith.constant 0 : index
    %3 = vector.load %arg4[%c0_2, %c0_3, %c0_4] : memref<1x8x32xf32, #tpu.memory_space<vmem>>, vector<1x8x32xf32>
    %4 = vector.shape_cast %3 : vector<1x8x32xf32> to vector<8x32xf32>
    %5 = arith.truncf %4 : vector<8x32xf32> to vector<8x32xbf16>
    %c0_5 = arith.constant 0 : index
    %c0_6 = arith.constant 0 : index
    %c0_7 = arith.constant 0 : index
    %6 = vector.load %arg5[%c0_5, %c0_6, %c0_7] : memref<1x8x32xf32, #tpu.memory_space<vmem>>, vector<1x8x32xf32>
    %7 = vector.shape_cast %6 : vector<1x8x32xf32> to vector<8x32xf32>
    %8 = arith.truncf %7 : vector<8x32xf32> to vector<8x32xbf16>
    %c0_8 = arith.constant 0 : index
    %c0_9 = arith.constant 0 : index
    %c0_10 = arith.constant 0 : index
    %9 = vector.load %arg6[%c0_8, %c0_9, %c0_10] : memref<1x32x8xbf16, #tpu.memory_space<vmem>>, vector<1x32x8xbf16>
    %10 = vector.shape_cast %9 : vector<1x32x8xbf16> to vector<32x8xbf16>
    %cst = arith.constant dense<0.000000e+00> : vector<8x8xf32>
    %11 = tpu.matmul %2, %10, %cst {dimension_numbers = #tpu.dot_dimension_numbers<[1], [0], [0], [1], [0, 0, 1, 1], [], []>} : vector<8x32xbf16>, vector<32x8xbf16>, vector<8x8xf32> -> vector<8x8xf32>
    %c0_11 = arith.constant 0 : index
    %c0_12 = arith.constant 0 : index
    %c0_13 = arith.constant 0 : index
    %12 = vector.load %arg7[%c0_11, %c0_12, %c0_13] : memref<1x1x8xf32, #tpu.memory_space<vmem>>, vector<1x1x8xf32>
    %13 = vector.shape_cast %12 : vector<1x1x8xf32> to vector<1x8xf32>
    %14 = vector.broadcast %13 : vector<1x8xf32> to vector<8x8xf32>
    %15 = arith.addf %11, %14 : vector<8x8xf32>
    %c0_14 = arith.constant 0 : index
    %c0_15 = arith.constant 0 : index
    %c0_16 = arith.constant 0 : index
    %16 = vector.load %arg8[%c0_14, %c0_15, %c0_16] : memref<1x32x8xbf16, #tpu.memory_space<vmem>>, vector<1x32x8xbf16>
    %17 = vector.shape_cast %16 : vector<1x32x8xbf16> to vector<32x8xbf16>
    %cst_17 = arith.constant dense<0.000000e+00> : vector<8x8xf32>
    %18 = tpu.matmul %5, %17, %cst_17 {dimension_numbers = #tpu.dot_dimension_numbers<[1], [0], [0], [1], [0, 0, 1, 1], [], []>} : vector<8x32xbf16>, vector<32x8xbf16>, vector<8x8xf32> -> vector<8x8xf32>
    %c0_18 = arith.constant 0 : index
    %c0_19 = arith.constant 0 : index
    %c0_20 = arith.constant 0 : index
    %19 = vector.load %arg9[%c0_18, %c0_19, %c0_20] : memref<1x1x8xf32, #tpu.memory_space<vmem>>, vector<1x1x8xf32>
    %20 = vector.shape_cast %19 : vector<1x1x8xf32> to vector<1x8xf32>
    %21 = vector.broadcast %20 : vector<1x8xf32> to vector<8x8xf32>
    %22 = arith.addf %18, %21 : vector<8x8xf32>
    %c0_21 = arith.constant 0 : index
    %c0_22 = arith.constant 0 : index
    %c0_23 = arith.constant 0 : index
    %23 = vector.load %arg10[%c0_21, %c0_22, %c0_23] : memref<1x32x8xbf16, #tpu.memory_space<vmem>>, vector<1x32x8xbf16>
    %24 = vector.shape_cast %23 : vector<1x32x8xbf16> to vector<32x8xbf16>
    %cst_24 = arith.constant dense<0.000000e+00> : vector<8x8xf32>
    %25 = tpu.matmul %8, %24, %cst_24 {dimension_numbers = #tpu.dot_dimension_numbers<[1], [0], [0], [1], [0, 0, 1, 1], [], []>} : vector<8x32xbf16>, vector<32x8xbf16>, vector<8x8xf32> -> vector<8x8xf32>
    %c0_25 = arith.constant 0 : index
    %c0_26 = arith.constant 0 : index
    %c0_27 = arith.constant 0 : index
    %26 = vector.load %arg11[%c0_25, %c0_26, %c0_27] : memref<1x1x8xf32, #tpu.memory_space<vmem>>, vector<1x1x8xf32>
    %27 = vector.shape_cast %26 : vector<1x1x8xf32> to vector<1x8xf32>
    %28 = vector.broadcast %27 : vector<1x8xf32> to vector<8x8xf32>
    %29 = arith.addf %25, %28 : vector<8x8xf32>
    %30 = arith.truncf %15 : vector<8x8xf32> to vector<8x8xbf16>
    %c0_28 = arith.constant 0 : index
    %c0_29 = arith.constant 0 : index
    %c0_30 = arith.constant 0 : index
    %c0_31 = arith.constant 0 : index
    %31 = vector.load %arg12[%c0_28, %c0_29, %c0_30, %c0_31] : memref<1x1x8x8xbf16, #tpu.memory_space<vmem>>, vector<1x1x8x8xbf16>
    %32 = vector.shape_cast %31 : vector<1x1x8x8xbf16> to vector<8x8xbf16>
    %33 = vector.shape_cast %30 : vector<8x8xbf16> to vector<1x1x8x8xbf16>
    tpu.vector_store %arg12[%c0_28, %c0_29, %c0_30, %c0_31], %33 {strides = array<i32>} : memref<1x1x8x8xbf16, #tpu.memory_space<vmem>>, vector<1x1x8x8xbf16>,
    %34 = arith.truncf %22 : vector<8x8xf32> to vector<8x8xbf16>
    %c0_32 = arith.constant 0 : index
    %c0_33 = arith.constant 0 : index
    %c0_34 = arith.constant 0 : index
    %c0_35 = arith.constant 0 : index
    %35 = vector.load %arg13[%c0_32, %c0_33, %c0_34, %c0_35] : memref<1x1x8x8xbf16, #tpu.memory_space<vmem>>, vector<1x1x8x8xbf16>
    %36 = vector.shape_cast %35 : vector<1x1x8x8xbf16> to vector<8x8xbf16>
    %37 = vector.shape_cast %34 : vector<8x8xbf16> to vector<1x1x8x8xbf16>
    tpu.vector_store %arg13[%c0_32, %c0_33, %c0_34, %c0_35], %37 {strides = array<i32>} : memref<1x1x8x8xbf16, #tpu.memory_space<vmem>>, vector<1x1x8x8xbf16>,
    %38 = arith.truncf %29 : vector<8x8xf32> to vector<8x8xbf16>
    %c0_36 = arith.constant 0 : index
    %c0_37 = arith.constant 0 : index
    %c0_38 = arith.constant 0 : index
    %c0_39 = arith.constant 0 : index
    %39 = vector.load %arg14[%c0_36, %c0_37, %c0_38, %c0_39] : memref<1x1x8x8xbf16, #tpu.memory_space<vmem>>, vector<1x1x8x8xbf16>
    %40 = vector.shape_cast %39 : vector<1x1x8x8xbf16> to vector<8x8xbf16>
    %41 = vector.shape_cast %38 : vector<8x8xbf16> to vector<1x1x8x8xbf16>
    tpu.vector_store %arg14[%c0_36, %c0_37, %c0_38, %c0_39], %41 {strides = array<i32>} : memref<1x1x8x8xbf16, #tpu.memory_space<vmem>>, vector<1x1x8x8xbf16>,
    return
  }
  func.func @transform_0(%arg0: i32, %arg1: i32, %arg2: i32) -> (i32, i32, i32) {
    %c0_i32 = arith.constant 0 : i32
    %c0_i32_0 = arith.constant 0 : i32
    return %arg0, %arg1, %c0_i32 : i32, i32, i32
  }
  func.func @transform_1(%arg0: i32, %arg1: i32, %arg2: i32) -> (i32, i32, i32) {
    %c0_i32 = arith.constant 0 : i32
    %c0_i32_0 = arith.constant 0 : i32
    return %arg0, %arg1, %c0_i32 : i32, i32, i32
  }
  func.func @transform_2(%arg0: i32, %arg1: i32, %arg2: i32) -> (i32, i32, i32) {
    %c0_i32 = arith.constant 0 : i32
    %c0_i32_0 = arith.constant 0 : i32
    return %arg0, %arg1, %c0_i32 : i32, i32, i32
  }
  func.func @transform_3(%arg0: i32, %arg1: i32, %arg2: i32) -> (i32, i32, i32) {
    %c0_i32 = arith.constant 0 : i32
    %c0_i32_0 = arith.constant 0 : i32
    %c0_i32_1 = arith.constant 0 : i32
    return %arg2, %c0_i32, %c0_i32_0 : i32, i32, i32
  }
  func.func @transform_4(%arg0: i32, %arg1: i32, %arg2: i32) -> (i32, i32, i32) {
    %c0_i32 = arith.constant 0 : i32
    %c0_i32_0 = arith.constant 0 : i32
    %c0_i32_1 = arith.constant 0 : i32
    return %arg2, %c0_i32, %c0_i32_0 : i32, i32, i32
  }
  func.func @transform_5(%arg0: i32, %arg1: i32, %arg2: i32) -> (i32, i32, i32) {
    %c0_i32 = arith.constant 0 : i32
    %c0_i32_0 = arith.constant 0 : i32
    %c0_i32_1 = arith.constant 0 : i32
    return %arg2, %c0_i32, %c0_i32_0 : i32, i32, i32
  }
  func.func @transform_6(%arg0: i32, %arg1: i32, %arg2: i32) -> (i32, i32, i32) {
    %c0_i32 = arith.constant 0 : i32
    %c0_i32_0 = arith.constant 0 : i32
    %c0_i32_1 = arith.constant 0 : i32
    return %arg2, %c0_i32, %c0_i32_0 : i32, i32, i32
  }
  func.func @transform_7(%arg0: i32, %arg1: i32, %arg2: i32) -> (i32, i32, i32) {
    %c0_i32 = arith.constant 0 : i32
    %c0_i32_0 = arith.constant 0 : i32
    %c0_i32_1 = arith.constant 0 : i32
    return %arg2, %c0_i32, %c0_i32_0 : i32, i32, i32
  }
  func.func @transform_8(%arg0: i32, %arg1: i32, %arg2: i32) -> (i32, i32, i32) {
    %c0_i32 = arith.constant 0 : i32
    %c0_i32_0 = arith.constant 0 : i32
    %c0_i32_1 = arith.constant 0 : i32
    return %arg2, %c0_i32, %c0_i32_0 : i32, i32, i32
  }
  func.func @transform_9(%arg0: i32, %arg1: i32, %arg2: i32) -> (i32, i32, i32, i32) {
    %c0_i32 = arith.constant 0 : i32
    %c0_i32_0 = arith.constant 0 : i32
    return %arg0, %arg2, %arg1, %c0_i32 : i32, i32, i32, i32
  }
  func.func @transform_10(%arg0: i32, %arg1: i32, %arg2: i32) -> (i32, i32, i32, i32) {
    %c0_i32 = arith.constant 0 : i32
    %c0_i32_0 = arith.constant 0 : i32
    return %arg0, %arg2, %arg1, %c0_i32 : i32, i32, i32, i32
  }
  func.func @transform_11(%arg0: i32, %arg1: i32, %arg2: i32) -> (i32, i32, i32, i32) {
    %c0_i32 = arith.constant 0 : i32
    %c0_i32_0 = arith.constant 0 : i32
    return %arg0, %arg2, %arg1, %c0_i32 : i32, i32, i32, i32
  }
}

</mosaic_0001>

<llo_original>
// kernel: tpu_custom_call.1
$region0: #{tpu_custom_call.1}
  #allocation0 [shape = 'u32[]', space=smem, size = 0x4, offset = 0x4, fixed_abs, tag = 'smem constant byte address 0x4 - core index']
  #allocation1 [shape = 'u32[144,128]{1,0:T(1,128)}', space=vmem, size = 0x12000, scoped, tag = 'internal scratch']
  %s0 = inlined_call_operand.hbm [shape: f32[2,8,32], index: 0, kind: input, shape index: {}]
  %s1 = inlined_call_operand.hbm [shape: f32[2,8,32], index: 1, kind: input, shape index: {}]
  %s2 = inlined_call_operand.hbm [shape: f32[2,8,32], index: 2, kind: input, shape index: {}]
  %s3 = inlined_call_operand.hbm [shape: bf16[4,32,8], index: 3, kind: input, shape index: {}]
  %s4 = inlined_call_operand.hbm [shape: f32[4,1,8], index: 4, kind: input, shape index: {}]
  %s5 = inlined_call_operand.hbm [shape: bf16[4,32,8], index: 5, kind: input, shape index: {}]
  %s6 = inlined_call_operand.hbm [shape: f32[4,1,8], index: 6, kind: input, shape index: {}]
  %s7 = inlined_call_operand.hbm [shape: bf16[4,32,8], index: 7, kind: input, shape index: {}]
  %s8 = inlined_call_operand.hbm [shape: f32[4,1,8], index: 8, kind: input, shape index: {}]
  %s9 = inlined_call_operand.hbm [shape: bf16[2,4,8,8], index: 9, kind: output, shape index: {0}]
  %s10 = inlined_call_operand.hbm [shape: bf16[2,4,8,8], index: 10, kind: output, shape index: {1}]
  %s11 = inlined_call_operand.hbm [shape: bf16[2,4,8,8], index: 11, kind: output, shape index: {2}]
  %12 = xla_tuple %s9, %s10, %s11
  %s13 = sld [smem:[#allocation0]]
  $region121: #{tpu_custom_call.1} parent=0
    _
  %s15 = ssub.s32 1, %s13
  %s16 = scalar_select 0, %s15, %s13
  $region1: #{tpu_custom_call.1} parent=0
    #allocation2 [shape = 'u8[8192]{0}', space=vmem, size = 0x2000, scoped, tag = 'input window, operand 0']
    #allocation3 [shape = 's32[2]{0}', space=sflag, size = 0x8, scoped, tag = 'scoped memory for tpu_custom_call.1']
    #allocation4 [shape = 's32[2]{0}', space=sflag, size = 0x8, scoped, tag = 'scoped memory for tpu_custom_call.1']
    #allocation5 [shape = 'u8[8192]{0}', space=vmem, size = 0x2000, scoped, tag = 'input window, operand 1']
    #allocation6 [shape = 's32[2]{0}', space=sflag, size = 0x8, scoped, tag = 'scoped memory for tpu_custom_call.1']
    #allocation7 [shape = 'u8[8192]{0}', space=vmem, size = 0x2000, scoped, tag = 'input window, operand 2']
    #allocation8 [shape = 'u8[16384]{0}', space=vmem, size = 0x4000, scoped, tag = 'input window, operand 3']
    #allocation9 [shape = 's32[2]{0}', space=sflag, size = 0x8, scoped, tag = 'scoped memory for tpu_custom_call.1']
    #allocation10 [shape = 'u8[1024]{0}', space=vmem, size = 0x400, scoped, tag = 'input window, operand 4']
    #allocation11 [shape = 'u8[16384]{0}', space=vmem, size = 0x4000, scoped, tag = 'input window, operand 5']
    #allocation12 [shape = 's32[2]{0}', space=sflag, size = 0x8, scoped, tag = 'scoped memory for tpu_custom_call.1']
    #allocation13 [shape = 'u8[1024]{0}', space=vmem, size = 0x400, scoped, tag = 'input window, operand 6']
    #allocation14 [shape = 'u8[16384]{0}', space=vmem, size = 0x4000, scoped, tag = 'input window, operand 7']
    #allocation15 [shape = 's32[2]{0}', space=sflag, size = 0x8, scoped, tag = 'scoped memory for tpu_custom_call.1']
    #allocation16 [shape = 'u8[1024]{0}', space=vmem, size = 0x400, scoped, tag = 'input window, operand 8']
    #allocation17 [shape = 'u8[4096]{0}', space=vmem, size = 0x1000, scoped, tag = 'output window, operand 0']
    #allocation18 [shape = 'u8[4096]{0}', space=vmem, size = 0x1000, scoped, tag = 'output window, operand 1']
    #allocation19 [shape = 's32[2]{0}', space=sflag, size = 0x8, scoped, tag = 'scoped memory for tpu_custom_call.1']
    #allocation20 [shape = 'u8[4096]{0}', space=vmem, size = 0x1000, scoped, tag = 'output window, operand 2']
    %17 = vsyncpa [#allocation3], 0
    %s18 = scalar_lea.sflag [#allocation3], 1
    %19 = vsyncpa %s18, 0
    %20 = vsyncpa [#allocation6], 0
    %s21 = scalar_lea.sflag [#allocation6], 1
    %22 = vsyncpa %s21, 0
    %23 = vsyncpa [#allocation9], 0
    %s24 = scalar_lea.sflag [#allocation9], 1
    %25 = vsyncpa %s24, 0
    %26 = vsyncpa [#allocation12], 0
    %s27 = scalar_lea.sflag [#allocation12], 1
    %28 = vsyncpa %s27, 0
    %29 = vsyncpa [#allocation15], 0
    %s30 = scalar_lea.sflag [#allocation15], 1
    %31 = vsyncpa %s30, 0
    %32 = vsyncpa [#allocation4], 0
    %s33 = scalar_lea.sflag [#allocation4], 1
    %34 = vsyncpa %s33, 0
    %35 = vsyncpa [#allocation19], 0
    %s36 = scalar_lea.sflag [#allocation19], 1
    %37 = vsyncpa %s36, 0
    loop: start=0, step=1, limit=10
    $region2: #{tpu_custom_call.1} parent=1 // loop_pre_header
      _
    $region3: #{tpu_custom_call.1} parent=1 // loop_header
      %s39 = sphi 0, %s43
      %p40 = scmp.ge.s32.totalorder %s39, 10
      %s46 = sphi 0, %s65
      %s47 = sphi 0, %s61
      %s48 = sphi 0, %s57
      %s49 = sphi 0, %s46
      %s50 = sphi 0, %s47
      %s51 = sphi 0, %s48
      %s52 = sphi 0, %s49
      %s53 = sphi 0, %s50
      %s54 = sphi 0, %s51
      %s70 = sphi 0, %s72
      %s73 = sphi 0, %s70
      %s74 = sphi 0, %s73
      %s90 = sphi 0, %s74
      %s98 = sphi 0, %s100
      %s101 = sphi 0, %s98
      %s102 = sphi 0, %s101
      %s118 = sphi 0, %s102
      %s126 = sphi 0, %s128
      %s129 = sphi 0, %s126
      %s130 = sphi 0, %s129
      %s146 = sphi 0, %s130
      %s152 = sphi 0, %s154
      %s155 = sphi 0, %s152
      %s156 = sphi 0, %s155
      %s172 = sphi 0, %s156
      %s178 = sphi 0, %s180
      %s181 = sphi 0, %s178
      %s182 = sphi 0, %s181
      %s198 = sphi 0, %s182
      %s204 = sphi 0, %s206
      %s207 = sphi 0, %s204
      %s208 = sphi 0, %s207
      %s224 = sphi 0, %s208
      %s230 = sphi 0, %s232
      %s233 = sphi 0, %s230
      %s234 = sphi 0, %s233
      %s250 = sphi 0, %s234
      %s256 = sphi 0, %s258
      %s259 = sphi 0, %s256
      %s260 = sphi 0, %s259
      %s276 = sphi 0, %s260
      %s282 = sphi 0, %s284
      %s285 = sphi 0, %s282
      %s286 = sphi 0, %s285
      %s302 = sphi 0, %s286
      %s312 = sphi 0, %s314
      %s315 = sphi 0, %s312
      %s316 = sphi 0, %s315
      %s332 = sphi 0, %s316
      %s342 = sphi 0, %s344
      %s345 = sphi 0, %s342
      %s346 = sphi 0, %s345
      %s362 = sphi 0, %s346
      %s372 = sphi 0, %s374
      %s375 = sphi 0, %s372
      %s376 = sphi 0, %s375
      %s392 = sphi 0, %s376
    $region4: #{tpu_custom_call.1} parent=1 // loop_header_branch
      %42 = sbr.rel (%p40) target = $region8
    $region5: #{tpu_custom_call.1} parent=1 // loop_body
      %s44 = ssub.s32 %s39, 1
      %s45 = ssub.s32 %s39, 2
      %s55 = sadd.s32 1, %s48
      %p56 = scmp.ge.s32.totalorder %s55, 4
      %s57 = scalar_select %p56, 0, %s55
      %s58 = sadd.s32 1, %s47
      %s59 = scalar_select %p56, %s58, %s47
      %p60 = scmp.ge.s32.totalorder %s59, 1
      %s61 = scalar_select %p60, 0, %s59
      %s62 = sadd.s32 1, %s46
      %s63 = scalar_select %p60, %s62, %s46
      %p64 = scmp.ge.s32.totalorder %s63, 2
      %s65 = scalar_select %p64, 0, %s63
      %s66 = ssub.s32 %s46, %s65
      %s67 = ssub.s32 %s47, %s61
      %s68 = sor.u32 %s66, %s67
      %p69 = scmp.eq.s32.totalorder %s68, 0
      %s71 = sadd.s32 %s70, 1
      %s72 = scalar_select %p69, %s70, %s71
      %p75 = pneg %p69
      %p76 = scmp.eq.s32.totalorder %s39, 7
      %p77 = por %p75, %p76
      %p78 = scmp.ne.s32.totalorder %s70, %s73
      %p79 = scmp.eq.s32.totalorder %s39, 0
      %p80 = por %p78, %p79
      %p81 = scmp.ne.s32.totalorder %s70, %s73
      %p82 = scmp.eq.s32.totalorder %s44, 7
      %p83 = por %p81, %p82
      %p84 = scmp.ne.s32.totalorder %s73, %s74
      %p85 = scmp.eq.s32.totalorder %s44, 0
      %p86 = por %p84, %p85
      %p87 = scmp.ne.s32.totalorder %s73, %s74
      %p88 = scmp.eq.s32.totalorder %s45, 7
      %p89 = por %p87, %p88
      %p91 = scmp.ne.s32.totalorder %s74, %s90
      %p92 = scmp.eq.s32.totalorder %s45, 0
      %p93 = por %p91, %p92
      %s94 = ssub.s32 %s46, %s65
      %s95 = ssub.s32 %s47, %s61
      %s96 = sor.u32 %s94, %s95
      %p97 = scmp.eq.s32.totalorder %s96, 0
      %s99 = sadd.s32 %s98, 1
      %s100 = scalar_select %p97, %s98, %s99
      %p103 = pneg %p97
      %p104 = scmp.eq.s32.totalorder %s39, 7
      %p105 = por %p103, %p104
      %p106 = scmp.ne.s32.totalorder %s98, %s101
      %p107 = scmp.eq.s32.totalorder %s39, 0
      %p108 = por %p106, %p107
      %p109 = scmp.ne.s32.totalorder %s98, %s101
      %p110 = scmp.eq.s32.totalorder %s44, 7
      %p111 = por %p109, %p110
      %p112 = scmp.ne.s32.totalorder %s101, %s102
      %p113 = scmp.eq.s32.totalorder %s44, 0
      %p114 = por %p112, %p113
      %p115 = scmp.ne.s32.totalorder %s101, %s102
      %p116 = scmp.eq.s32.totalorder %s45, 7
      %p117 = por %p115, %p116
      %p119 = scmp.ne.s32.totalorder %s102, %s118
      %p120 = scmp.eq.s32.totalorder %s45, 0
      %p121 = por %p119, %p120
      %s122 = ssub.s32 %s46, %s65
      %s123 = ssub.s32 %s47, %s61
      %s124 = sor.u32 %s122, %s123
      %p125 = scmp.eq.s32.totalorder %s124, 0
      %s127 = sadd.s32 %s126, 1
      %s128 = scalar_select %p125, %s126, %s127
      %p131 = pneg %p125
      %p132 = scmp.eq.s32.totalorder %s39, 7
      %p133 = por %p131, %p132
      %p134 = scmp.ne.s32.totalorder %s126, %s129
      %p135 = scmp.eq.s32.totalorder %s39, 0
      %p136 = por %p134, %p135
      %p137 = scmp.ne.s32.totalorder %s126, %s129
      %p138 = scmp.eq.s32.totalorder %s44, 7
      %p139 = por %p137, %p138
      %p140 = scmp.ne.s32.totalorder %s129, %s130
      %p141 = scmp.eq.s32.totalorder %s44, 0
      %p142 = por %p140, %p141
      %p143 = scmp.ne.s32.totalorder %s129, %s130
      %p144 = scmp.eq.s32.totalorder %s45, 7
      %p145 = por %p143, %p144
      %p147 = scmp.ne.s32.totalorder %s130, %s146
      %p148 = scmp.eq.s32.totalorder %s45, 0
      %p149 = por %p147, %p148
      %s150 = ssub.s32 %s48, %s57
      %p151 = scmp.eq.s32.totalorder %s150, 0
      %s153 = sadd.s32 %s152, 1
      %s154 = scalar_select %p151, %s152, %s153
      %p157 = pneg %p151
      %p158 = scmp.eq.s32.totalorder %s39, 7
      %p159 = por %p157, %p158
      %p160 = scmp.ne.s32.totalorder %s152, %s155
      %p161 = scmp.eq.s32.totalorder %s39, 0
      %p162 = por %p160, %p161
      %p163 = scmp.ne.s32.totalorder %s152, %s155
      %p164 = scmp.eq.s32.totalorder %s44, 7
      %p165 = por %p163, %p164
      %p166 = scmp.ne.s32.totalorder %s155, %s156
      %p167 = scmp.eq.s32.totalorder %s44, 0
      %p168 = por %p166, %p167
      %p169 = scmp.ne.s32.totalorder %s155, %s156
      %p170 = scmp.eq.s32.totalorder %s45, 7
      %p171 = por %p169, %p170
      %p173 = scmp.ne.s32.totalorder %s156, %s172
      %p174 = scmp.eq.s32.totalorder %s45, 0
      %p175 = por %p173, %p174
      %s176 = ssub.s32 %s48, %s57
      %p177 = scmp.eq.s32.totalorder %s176, 0
      %s179 = sadd.s32 %s178, 1
      %s180 = scalar_select %p177, %s178, %s179
      %p183 = pneg %p177
      %p184 = scmp.eq.s32.totalorder %s39, 7
      %p185 = por %p183, %p184
      %p186 = scmp.ne.s32.totalorder %s178, %s181
      %p187 = scmp.eq.s32.totalorder %s39, 0
      %p188 = por %p186, %p187
      %p189 = scmp.ne.s32.totalorder %s178, %s181
      %p190 = scmp.eq.s32.totalorder %s44, 7
      %p191 = por %p189, %p190
      %p192 = scmp.ne.s32.totalorder %s181, %s182
      %p193 = scmp.eq.s32.totalorder %s44, 0
      %p194 = por %p192, %p193
      %p195 = scmp.ne.s32.totalorder %s181, %s182
      %p196 = scmp.eq.s32.totalorder %s45, 7
      %p197 = por %p195, %p196
      %p199 = scmp.ne.s32.totalorder %s182, %s198
      %p200 = scmp.eq.s32.totalorder %s45, 0
      %p201 = por %p199, %p200
      %s202 = ssub.s32 %s48, %s57
      %p203 = scmp.eq.s32.totalorder %s202, 0
      %s205 = sadd.s32 %s204, 1
      %s206 = scalar_select %p203, %s204, %s205
      %p209 = pneg %p203
      %p210 = scmp.eq.s32.totalorder %s39, 7
      %p211 = por %p209, %p210
      %p212 = scmp.ne.s32.totalorder %s204, %s207
      %p213 = scmp.eq.s32.totalorder %s39, 0
      %p214 = por %p212, %p213
      %p215 = scmp.ne.s32.totalorder %s204, %s207
      %p216 = scmp.eq.s32.totalorder %s44, 7
      %p217 = por %p215, %p216
      %p218 = scmp.ne.s32.totalorder %s207, %s208
      %p219 = scmp.eq.s32.totalorder %s44, 0
      %p220 = por %p218, %p219
      %p221 = scmp.ne.s32.totalorder %s207, %s208
      %p222 = scmp.eq.s32.totalorder %s45, 7
      %p223 = por %p221, %p222
      %p225 = scmp.ne.s32.totalorder %s208, %s224
      %p226 = scmp.eq.s32.totalorder %s45, 0
      %p227 = por %p225, %p226
      %s228 = ssub.s32 %s48, %s57
      %p229 = scmp.eq.s32.totalorder %s228, 0
      %s231 = sadd.s32 %s230, 1
      %s232 = scalar_select %p229, %s230, %s231
      %p235 = pneg %p229
      %p236 = scmp.eq.s32.totalorder %s39, 7
      %p237 = por %p235, %p236
      %p238 = scmp.ne.s32.totalorder %s230, %s233
      %p239 = scmp.eq.s32.totalorder %s39, 0
      %p240 = por %p238, %p239
      %p241 = scmp.ne.s32.totalorder %s230, %s233
      %p242 = scmp.eq.s32.totalorder %s44, 7
      %p243 = por %p241, %p242
      %p244 = scmp.ne.s32.totalorder %s233, %s234
      %p245 = scmp.eq.s32.totalorder %s44, 0
      %p246 = por %p244, %p245
      %p247 = scmp.ne.s32.totalorder %s233, %s234
      %p248 = scmp.eq.s32.totalorder %s45, 7
      %p249 = por %p247, %p248
      %p251 = scmp.ne.s32.totalorder %s234, %s250
      %p252 = scmp.eq.s32.totalorder %s45, 0
      %p253 = por %p251, %p252
      %s254 = ssub.s32 %s48, %s57
      %p255 = scmp.eq.s32.totalorder %s254, 0
      %s257 = sadd.s32 %s256, 1
      %s258 = scalar_select %p255, %s256, %s257
      %p261 = pneg %p255
      %p262 = scmp.eq.s32.totalorder %s39, 7
      %p263 = por %p261, %p262
      %p264 = scmp.ne.s32.totalorder %s256, %s259
      %p265 = scmp.eq.s32.totalorder %s39, 0
      %p266 = por %p264, %p265
      %p267 = scmp.ne.s32.totalorder %s256, %s259
      %p268 = scmp.eq.s32.totalorder %s44, 7
      %p269 = por %p267, %p268
      %p270 = scmp.ne.s32.totalorder %s259, %s260
      %p271 = scmp.eq.s32.totalorder %s44, 0
      %p272 = por %p270, %p271
      %p273 = scmp.ne.s32.totalorder %s259, %s260
      %p274 = scmp.eq.s32.totalorder %s45, 7
      %p275 = por %p273, %p274
      %p277 = scmp.ne.s32.totalorder %s260, %s276
      %p278 = scmp.eq.s32.totalorder %s45, 0
      %p279 = por %p277, %p278
      %s280 = ssub.s32 %s48, %s57
      %p281 = scmp.eq.s32.totalorder %s280, 0
      %s283 = sadd.s32 %s282, 1
      %s284 = scalar_select %p281, %s282, %s283
      %p287 = pneg %p281
      %p288 = scmp.eq.s32.totalorder %s39, 7
      %p289 = por %p287, %p288
      %p290 = scmp.ne.s32.totalorder %s282, %s285
      %p291 = scmp.eq.s32.totalorder %s39, 0
      %p292 = por %p290, %p291
      %p293 = scmp.ne.s32.totalorder %s282, %s285
      %p294 = scmp.eq.s32.totalorder %s44, 7
      %p295 = por %p293, %p294
      %p296 = scmp.ne.s32.totalorder %s285, %s286
      %p297 = scmp.eq.s32.totalorder %s44, 0
      %p298 = por %p296, %p297
      %p299 = scmp.ne.s32.totalorder %s285, %s286
      %p300 = scmp.eq.s32.totalorder %s45, 7
      %p301 = por %p299, %p300
      %p303 = scmp.ne.s32.totalorder %s286, %s302
      %p304 = scmp.eq.s32.totalorder %s45, 0
      %p305 = por %p303, %p304
      %s306 = ssub.s32 %s46, %s65
      %s307 = ssub.s32 %s48, %s57
      %s308 = sor.u32 %s306, %s307
      %s309 = ssub.s32 %s47, %s61
      %s310 = sor.u32 %s308, %s309
      %p311 = scmp.eq.s32.totalorder %s310, 0
      %s313 = sadd.s32 %s312, 1
      %s314 = scalar_select %p311, %s312, %s313
      %p317 = pneg %p311
      %p318 = scmp.eq.s32.totalorder %s39, 7
      %p319 = por %p317, %p318
      %p320 = scmp.ne.s32.totalorder %s312, %s315
      %p321 = scmp.eq.s32.totalorder %s39, 0
      %p322 = por %p320, %p321
      %p323 = scmp.ne.s32.totalorder %s312, %s315
      %p324 = scmp.eq.s32.totalorder %s44, 7
      %p325 = por %p323, %p324
      %p326 = scmp.ne.s32.totalorder %s315, %s316
      %p327 = scmp.eq.s32.totalorder %s44, 0
      %p328 = por %p326, %p327
      %p329 = scmp.ne.s32.totalorder %s315, %s316
      %p330 = scmp.eq.s32.totalorder %s45, 7
      %p331 = por %p329, %p330
      %p333 = scmp.ne.s32.totalorder %s316, %s332
      %p334 = scmp.eq.s32.totalorder %s45, 0
      %p335 = por %p333, %p334
      %s336 = ssub.s32 %s46, %s65
      %s337 = ssub.s32 %s48, %s57
      %s338 = sor.u32 %s336, %s337
      %s339 = ssub.s32 %s47, %s61
      %s340 = sor.u32 %s338, %s339
      %p341 = scmp.eq.s32.totalorder %s340, 0
      %s343 = sadd.s32 %s342, 1
      %s344 = scalar_select %p341, %s342, %s343
      %p347 = pneg %p341
      %p348 = scmp.eq.s32.totalorder %s39, 7
      %p349 = por %p347, %p348
      %p350 = scmp.ne.s32.totalorder %s342, %s345
      %p351 = scmp.eq.s32.totalorder %s39, 0
      %p352 = por %p350, %p351
      %p353 = scmp.ne.s32.totalorder %s342, %s345
      %p354 = scmp.eq.s32.totalorder %s44, 7
      %p355 = por %p353, %p354
      %p356 = scmp.ne.s32.totalorder %s345, %s346
      %p357 = scmp.eq.s32.totalorder %s44, 0
      %p358 = por %p356, %p357
      %p359 = scmp.ne.s32.totalorder %s345, %s346
      %p360 = scmp.eq.s32.totalorder %s45, 7
      %p361 = por %p359, %p360
      %p363 = scmp.ne.s32.totalorder %s346, %s362
      %p364 = scmp.eq.s32.totalorder %s45, 0
      %p365 = por %p363, %p364
      %s366 = ssub.s32 %s46, %s65
      %s367 = ssub.s32 %s48, %s57
      %s368 = sor.u32 %s366, %s367
      %s369 = ssub.s32 %s47, %s61
      %s370 = sor.u32 %s368, %s369
      %p371 = scmp.eq.s32.totalorder %s370, 0
      %s373 = sadd.s32 %s372, 1
      %s374 = scalar_select %p371, %s372, %s373
      %p377 = pneg %p371
      %p378 = scmp.eq.s32.totalorder %s39, 7
      %p379 = por %p377, %p378
      %p380 = scmp.ne.s32.totalorder %s372, %s375
      %p381 = scmp.eq.s32.totalorder %s39, 0
      %p382 = por %p380, %p381
      %p383 = scmp.ne.s32.totalorder %s372, %s375
      %p384 = scmp.eq.s32.totalorder %s44, 7
      %p385 = por %p383, %p384
      %p386 = scmp.ne.s32.totalorder %s375, %s376
      %p387 = scmp.eq.s32.totalorder %s44, 0
      %p388 = por %p386, %p387
      %p389 = scmp.ne.s32.totalorder %s375, %s376
      %p390 = scmp.eq.s32.totalorder %s45, 7
      %p391 = por %p389, %p390
      %p393 = scmp.ne.s32.totalorder %s376, %s392
      %p394 = scmp.eq.s32.totalorder %s45, 0
      %p395 = por %p393, %p394
      %p396 = scmp.le.s32.totalorder 1, %s39
      %p397 = scmp.lt.s32.totalorder %s39, 9
      %p398 = pnand %p396, %p397
      %p399 = pneg %p398
      // Predicated region
      $region9: #{tpu_custom_call.1} parent=5 // pred_check
        _
      $region10: #{tpu_custom_call.1} parent=5 // pred_check_branch
        %401 = sbr.rel (%p398) target = $region12
      $region11: #{tpu_custom_call.1} parent=5 // pred_region
        %s402 = ssub.s32 %s39, 1
      $region12: #{tpu_custom_call.1} parent=5 // pred_fallthru
        _
      %p403 = scmp.lt.s32.totalorder %s39, 8
      // Predicated region
      $region13: #{tpu_custom_call.1} parent=5 // pred_check
        %p404 = pneg %p403
      $region14: #{tpu_custom_call.1} parent=5 // pred_check_branch
        %406 = sbr.rel (%p404) target = $region16
      $region15: #{tpu_custom_call.1} parent=5 // pred_region
        // Predicated region
        $region17: #{tpu_custom_call.1} parent=15 // pred_check
          %p407 = pneg %p80
        $region18: #{tpu_custom_call.1} parent=15 // pred_check_branch
          %409 = sbr.rel (%p407) target = $region20
        $region19: #{tpu_custom_call.1} parent=15 // pred_region
          %s410 = sand.u32 %s70, 1
          %s411 = scalar_lea.sflag [#allocation3], %s410
          %s412 = sand.u32 %s70, 1
          %s413 = smul.addr %s412, 8
          %s414 = scalar_lea.vmem [#allocation2], %s413
          %s416 = ssub.s32 128, 128
          %417 = vsyncadd %s411, %s416
          %s418 = sadd.s32 %s47, %s46
          %s419 = smul.addr %s418, 128
          %s420 = scalar_lea.hbm %s0, %s419
          %s422 = sshll.u32 %s414, 4
          %s423 = int_to_ptr.vmem [resolvable:$true] %s422
          %425 = dma.hbm_to_vmem [thread:$0]  %s420, 128, %s423, %s411
        $region20: #{tpu_custom_call.1} parent=15 // pred_fallthru
          _
        // Predicated region
        $region21: #{tpu_custom_call.1} parent=15 // pred_check
          %p426 = pneg %p108
        $region22: #{tpu_custom_call.1} parent=15 // pred_check_branch
          %428 = sbr.rel (%p426) target = $region24
        $region23: #{tpu_custom_call.1} parent=15 // pred_region
          %s429 = sand.u32 %s39, 1
          %s430 = scalar_lea.sflag [#allocation6], %s429
          %s431 = sand.u32 %s98, 1
          %s432 = smul.addr %s431, 8
          %s433 = scalar_lea.vmem [#allocation5], %s432
          %s435 = ssub.s32 128, 128
          %436 = vsyncadd %s430, %s435
          %s437 = sadd.s32 %s47, %s46
          %s438 = smul.addr %s437, 128
          %s439 = scalar_lea.hbm %s1, %s438
          %s441 = sshll.u32 %s433, 4
          %s442 = int_to_ptr.vmem [resolvable:$true] %s441
          %444 = dma.hbm_to_vmem [thread:$0]  %s439, 128, %s442, %s430
        $region24: #{tpu_custom_call.1} parent=15 // pred_fallthru
          _
        // Predicated region
        $region25: #{tpu_custom_call.1} parent=15 // pred_check
          %p445 = pneg %p136
        $region26: #{tpu_custom_call.1} parent=15 // pred_check_branch
          %447 = sbr.rel (%p445) target = $region28
        $region27: #{tpu_custom_call.1} parent=15 // pred_region
          %s448 = sand.u32 %s39, 1
          %s449 = scalar_lea.sflag [#allocation6], %s448
          %s450 = sand.u32 %s126, 1
          %s451 = smul.addr %s450, 8
          %s452 = scalar_lea.vmem [#allocation7], %s451
          %s454 = ssub.s32 128, 128
          %455 = vsyncadd %s449, %s454
          %s456 = sadd.s32 %s47, %s46
          %s457 = smul.addr %s456, 128
          %s458 = scalar_lea.hbm %s2, %s457
          %s460 = sshll.u32 %s452, 4
          %s461 = int_to_ptr.vmem [resolvable:$true] %s460
          %463 = dma.hbm_to_vmem [thread:$0]  %s458, 128, %s461, %s449
        $region28: #{tpu_custom_call.1} parent=15 // pred_fallthru
          _
        // Predicated region
        $region29: #{tpu_custom_call.1} parent=15 // pred_check
          %p464 = pneg %p162
        $region30: #{tpu_custom_call.1} parent=15 // pred_check_branch
          %466 = sbr.rel (%p464) target = $region32
        $region31: #{tpu_custom_call.1} parent=15 // pred_region
          %s467 = sand.u32 %s39, 1
          %s468 = scalar_lea.sflag [#allocation9], %s467
          %s469 = sand.u32 %s152, 1
          %s470 = smul.addr %s469, 16
          %s471 = scalar_lea.vmem [#allocation8], %s470
          %s473 = ssub.s32 256, 256
          %474 = vsyncadd %s468, %s473
          %s475 = smul.addr %s48, 4
          %s476 = smul.addr %s475, 64
          %s477 = scalar_lea.hbm %s3, %s476
          %s478 = sshll.u32 %s471, 4
          %s479 = int_to_ptr.vmem [resolvable:$true] %s478
          %484 = dma.hbm_to_vmem [thread:$0]  %s477, 256, %s479, %s468, 64, 64, 4
        $region32: #{tpu_custom_call.1} parent=15 // pred_fallthru
          _
        // Predicated region
        $region33: #{tpu_custom_call.1} parent=15 // pred_check
          %p485 = pneg %p188
        $region34: #{tpu_custom_call.1} parent=15 // pred_check_branch
          %487 = sbr.rel (%p485) target = $region36
        $region35: #{tpu_custom_call.1} parent=15 // pred_region
          %s488 = sand.u32 %s39, 1
          %s489 = scalar_lea.sflag [#allocation9], %s488
          %s490 = sand.u32 %s178, 1
          %s491 = scalar_lea.vmem [#allocation10], %s490
          %s493 = ssub.s32 16, 16
          %494 = vsyncadd %s489, %s493
          %s495 = smul.addr %s48, 16
          %s496 = scalar_lea.hbm %s4, %s495
          %s498 = sshll.u32 %s491, 4
          %s499 = int_to_ptr.vmem [resolvable:$true] %s498
          %501 = dma.hbm_to_vmem [thread:$0]  %s496, 16, %s499, %s489
        $region36: #{tpu_custom_call.1} parent=15 // pred_fallthru
          _
        // Predicated region
        $region37: #{tpu_custom_call.1} parent=15 // pred_check
          %p502 = pneg %p214
        $region38: #{tpu_custom_call.1} parent=15 // pred_check_branch
          %504 = sbr.rel (%p502) target = $region40
        $region39: #{tpu_custom_call.1} parent=15 // pred_region
          %s505 = sand.u32 %s39, 1
          %s506 = scalar_lea.sflag [#allocation12], %s505
          %s507 = sand.u32 %s204, 1
          %s508 = smul.addr %s507, 16
          %s509 = scalar_lea.vmem [#allocation11], %s508
          %s511 = ssub.s32 256, 256
          %512 = vsyncadd %s506, %s511
          %s513 = smul.addr %s48, 4
          %s514 = smul.addr %s513, 64
          %s515 = scalar_lea.hbm %s5, %s514
          %s516 = sshll.u32 %s509, 4
          %s517 = int_to_ptr.vmem [resolvable:$true] %s516
          %522 = dma.hbm_to_vmem [thread:$0]  %s515, 256, %s517, %s506, 64, 64, 4
        $region40: #{tpu_custom_call.1} parent=15 // pred_fallthru
          _
        // Predicated region
        $region41: #{tpu_custom_call.1} parent=15 // pred_check
          %p523 = pneg %p240
        $region42: #{tpu_custom_call.1} parent=15 // pred_check_branch
          %525 = sbr.rel (%p523) target = $region44
        $region43: #{tpu_custom_call.1} parent=15 // pred_region
          %s526 = sand.u32 %s39, 1
          %s527 = scalar_lea.sflag [#allocation12], %s526
          %s528 = sand.u32 %s230, 1
          %s529 = scalar_lea.vmem [#allocation13], %s528
          %s531 = ssub.s32 16, 16
          %532 = vsyncadd %s527, %s531
          %s533 = smul.addr %s48, 16
          %s534 = scalar_lea.hbm %s6, %s533
          %s536 = sshll.u32 %s529, 4
          %s537 = int_to_ptr.vmem [resolvable:$true] %s536
          %539 = dma.hbm_to_vmem [thread:$0]  %s534, 16, %s537, %s527
        $region44: #{tpu_custom_call.1} parent=15 // pred_fallthru
          _
        // Predicated region
        $region45: #{tpu_custom_call.1} parent=15 // pred_check
          %p540 = pneg %p266
        $region46: #{tpu_custom_call.1} parent=15 // pred_check_branch
          %542 = sbr.rel (%p540) target = $region48
        $region47: #{tpu_custom_call.1} parent=15 // pred_region
          %s543 = sand.u32 %s39, 1
          %s544 = scalar_lea.sflag [#allocation15], %s543
          %s545 = sand.u32 %s256, 1
          %s546 = smul.addr %s545, 16
          %s547 = scalar_lea.vmem [#allocation14], %s546
          %s549 = ssub.s32 256, 256
          %550 = vsyncadd %s544, %s549
          %s551 = smul.addr %s48, 4
          %s552 = smul.addr %s551, 64
          %s553 = scalar_lea.hbm %s7, %s552
          %s554 = sshll.u32 %s547, 4
          %s555 = int_to_ptr.vmem [resolvable:$true] %s554
          %560 = dma.hbm_to_vmem [thread:$0]  %s553, 256, %s555, %s544, 64, 64, 4
        $region48: #{tpu_custom_call.1} parent=15 // pred_fallthru
          _
        // Predicated region
        $region49: #{tpu_custom_call.1} parent=15 // pred_check
          %p561 = pneg %p292
        $region50: #{tpu_custom_call.1} parent=15 // pred_check_branch
          %563 = sbr.rel (%p561) target = $region52
        $region51: #{tpu_custom_call.1} parent=15 // pred_region
          %s564 = sand.u32 %s39, 1
          %s565 = scalar_lea.sflag [#allocation15], %s564
          %s566 = sand.u32 %s282, 1
          %s567 = scalar_lea.vmem [#allocation16], %s566
          %s569 = ssub.s32 16, 16
          %570 = vsyncadd %s565, %s569
          %s571 = smul.addr %s48, 16
          %s572 = scalar_lea.hbm %s8, %s571
          %s574 = sshll.u32 %s567, 4
          %s575 = int_to_ptr.vmem [resolvable:$true] %s574
          %577 = dma.hbm_to_vmem [thread:$0]  %s572, 16, %s575, %s565
        $region52: #{tpu_custom_call.1} parent=15 // pred_fallthru
          _
      $region16: #{tpu_custom_call.1} parent=5 // pred_fallthru
        _
      %p578 = scmp.le.s32.totalorder 1, %s39
      %p579 = scmp.lt.s32.totalorder %s39, 9
      %p580 = pnand %p578, %p579
      %p581 = pneg %p580
      // Predicated region
      $region53: #{tpu_custom_call.1} parent=5 // pred_check
        _
      $region54: #{tpu_custom_call.1} parent=5 // pred_check_branch
        %583 = sbr.rel (%p580) target = $region56
      $region55: #{tpu_custom_call.1} parent=5 // pred_region
        %s584 = ssub.s32 %s39, 1
        %s585 = sand.u32 %s73, 1
        %s586 = scalar_lea.sflag [#allocation3], %s585
        %s587 = sand.u32 %s73, 1
        %s588 = smul.addr %s587, 8
        %s589 = scalar_lea.vmem [#allocation2], %s588
        // Predicated region
        $region57: #{tpu_custom_call.1} parent=55 // pred_check
          %p590 = pneg %p86
        $region58: #{tpu_custom_call.1} parent=55 // pred_check_branch
          %592 = sbr.rel (%p590) target = $region60
        $region59: #{tpu_custom_call.1} parent=55 // pred_region
          %593 = dma.done %s586, 128
        $region60: #{tpu_custom_call.1} parent=55 // pred_fallthru
          _
        %s594 = sand.u32 %s44, 1
        %s595 = scalar_lea.sflag [#allocation6], %s594
        %s596 = sand.u32 %s101, 1
        %s597 = smul.addr %s596, 8
        %s598 = scalar_lea.vmem [#allocation5], %s597
        // Predicated region
        $region61: #{tpu_custom_call.1} parent=55 // pred_check
          %p599 = pneg %p114
        $region62: #{tpu_custom_call.1} parent=55 // pred_check_branch
          %601 = sbr.rel (%p599) target = $region64
        $region63: #{tpu_custom_call.1} parent=55 // pred_region
          %602 = dma.done %s595, 128
        $region64: #{tpu_custom_call.1} parent=55 // pred_fallthru
          _
        %s603 = sand.u32 %s44, 1
        %s604 = scalar_lea.sflag [#allocation6], %s603
        %s605 = sand.u32 %s129, 1
        %s606 = smul.addr %s605, 8
        %s607 = scalar_lea.vmem [#allocation7], %s606
        // Predicated region
        $region65: #{tpu_custom_call.1} parent=55 // pred_check
          %p608 = pneg %p142
        $region66: #{tpu_custom_call.1} parent=55 // pred_check_branch
          %610 = sbr.rel (%p608) target = $region68
        $region67: #{tpu_custom_call.1} parent=55 // pred_region
          %611 = dma.done %s604, 128
        $region68: #{tpu_custom_call.1} parent=55 // pred_fallthru
          _
        %s612 = sand.u32 %s44, 1
        %s613 = scalar_lea.sflag [#allocation9], %s612
        %s614 = sand.u32 %s155, 1
        %s615 = smul.addr %s614, 16
        %s616 = scalar_lea.vmem [#allocation8], %s615
        // Predicated region
        $region69: #{tpu_custom_call.1} parent=55 // pred_check
          %p617 = pneg %p168
        $region70: #{tpu_custom_call.1} parent=55 // pred_check_branch
          %619 = sbr.rel (%p617) target = $region72
        $region71: #{tpu_custom_call.1} parent=55 // pred_region
          %620 = dma.done %s613, 256
        $region72: #{tpu_custom_call.1} parent=55 // pred_fallthru
          _
        %s621 = sand.u32 %s44, 1
        %s622 = scalar_lea.sflag [#allocation9], %s621
        %s623 = sand.u32 %s181, 1
        %s624 = scalar_lea.vmem [#allocation10], %s623
        // Predicated region
        $region73: #{tpu_custom_call.1} parent=55 // pred_check
          %p625 = pneg %p194
        $region74: #{tpu_custom_call.1} parent=55 // pred_check_branch
          %627 = sbr.rel (%p625) target = $region76
        $region75: #{tpu_custom_call.1} parent=55 // pred_region
          %628 = dma.done %s622, 16
        $region76: #{tpu_custom_call.1} parent=55 // pred_fallthru
          _
        %s629 = sand.u32 %s44, 1
        %s630 = scalar_lea.sflag [#allocation12], %s629
        %s631 = sand.u32 %s207, 1
        %s632 = smul.addr %s631, 16
        %s633 = scalar_lea.vmem [#allocation11], %s632
        // Predicated region
        $region77: #{tpu_custom_call.1} parent=55 // pred_check
          %p634 = pneg %p220
        $region78: #{tpu_custom_call.1} parent=55 // pred_check_branch
          %636 = sbr.rel (%p634) target = $region80
        $region79: #{tpu_custom_call.1} parent=55 // pred_region
          %637 = dma.done %s630, 256
        $region80: #{tpu_custom_call.1} parent=55 // pred_fallthru
          _
        %s638 = sand.u32 %s44, 1
        %s639 = scalar_lea.sflag [#allocation12], %s638
        %s640 = sand.u32 %s233, 1
        %s641 = scalar_lea.vmem [#allocation13], %s640
        // Predicated region
        $region81: #{tpu_custom_call.1} parent=55 // pred_check
          %p642 = pneg %p246
        $region82: #{tpu_custom_call.1} parent=55 // pred_check_branch
          %644 = sbr.rel (%p642) target = $region84
        $region83: #{tpu_custom_call.1} parent=55 // pred_region
          %645 = dma.done %s639, 16
        $region84: #{tpu_custom_call.1} parent=55 // pred_fallthru
          _
        %s646 = sand.u32 %s44, 1
        %s647 = scalar_lea.sflag [#allocation15], %s646
        %s648 = sand.u32 %s259, 1
        %s649 = smul.addr %s648, 16
        %s650 = scalar_lea.vmem [#allocation14], %s649
        // Predicated region
        $region85: #{tpu_custom_call.1} parent=55 // pred_check
          %p651 = pneg %p272
        $region86: #{tpu_custom_call.1} parent=55 // pred_check_branch
          %653 = sbr.rel (%p651) target = $region88
        $region87: #{tpu_custom_call.1} parent=55 // pred_region
          %654 = dma.done %s647, 256
        $region88: #{tpu_custom_call.1} parent=55 // pred_fallthru
          _
        %s655 = sand.u32 %s44, 1
        %s656 = scalar_lea.sflag [#allocation15], %s655
        %s657 = sand.u32 %s285, 1
        %s658 = scalar_lea.vmem [#allocation16], %s657
        // Predicated region
        $region89: #{tpu_custom_call.1} parent=55 // pred_check
          %p659 = pneg %p298
        $region90: #{tpu_custom_call.1} parent=55 // pred_check_branch
          %661 = sbr.rel (%p659) target = $region92
        $region91: #{tpu_custom_call.1} parent=55 // pred_region
          %662 = dma.done %s656, 16
        $region92: #{tpu_custom_call.1} parent=55 // pred_fallthru
          _
        %s663 = sand.u32 %s73, 1
        %s664 = scalar_lea.sflag [#allocation3], %s663
        %s665 = sand.u32 %s73, 1
        %s666 = smul.addr %s665, 8
        %s667 = scalar_lea.vmem [#allocation2], %s666
        %p668 = pneg %p86
        %p669 = pneg %p83
        %s670 = sand.u32 %s44, 1
        %s671 = scalar_lea.sflag [#allocation6], %s670
        %s672 = sand.u32 %s101, 1
        %s673 = smul.addr %s672, 8
        %s674 = scalar_lea.vmem [#allocation5], %s673
        %p675 = pneg %p114
        %p676 = pneg %p111
        %s677 = sand.u32 %s44, 1
        %s678 = scalar_lea.sflag [#allocation6], %s677
        %s679 = sand.u32 %s129, 1
        %s680 = smul.addr %s679, 8
        %s681 = scalar_lea.vmem [#allocation7], %s680
        %p682 = pneg %p142
        %p683 = pneg %p139
        %s684 = sand.u32 %s44, 1
        %s685 = scalar_lea.sflag [#allocation9], %s684
        %s686 = sand.u32 %s155, 1
        %s687 = smul.addr %s686, 16
        %s688 = scalar_lea.vmem [#allocation8], %s687
        %p689 = pneg %p168
        %p690 = pneg %p165
        %s691 = sand.u32 %s44, 1
        %s692 = scalar_lea.sflag [#allocation9], %s691
        %s693 = sand.u32 %s181, 1
        %s694 = scalar_lea.vmem [#allocation10], %s693
        %p695 = pneg %p194
        %p696 = pneg %p191
        %s697 = sand.u32 %s44, 1
        %s698 = scalar_lea.sflag [#allocation12], %s697
        %s699 = sand.u32 %s207, 1
        %s700 = smul.addr %s699, 16
        %s701 = scalar_lea.vmem [#allocation11], %s700
        %p702 = pneg %p220
        %p703 = pneg %p217
        %s704 = sand.u32 %s44, 1
        %s705 = scalar_lea.sflag [#allocation12], %s704
        %s706 = sand.u32 %s233, 1
        %s707 = scalar_lea.vmem [#allocation13], %s706
        %p708 = pneg %p246
        %p709 = pneg %p243
        %s710 = sand.u32 %s44, 1
        %s711 = scalar_lea.sflag [#allocation15], %s710
        %s712 = sand.u32 %s259, 1
        %s713 = smul.addr %s712, 16
        %s714 = scalar_lea.vmem [#allocation14], %s713
        %p715 = pneg %p272
        %p716 = pneg %p269
        %s717 = sand.u32 %s44, 1
        %s718 = scalar_lea.sflag [#allocation15], %s717
        %s719 = sand.u32 %s285, 1
        %s720 = scalar_lea.vmem [#allocation16], %s719
        %p721 = pneg %p298
        %p722 = pneg %p295
        %p723 = pneg %p328
        %p724 = pneg %p325
        %s725 = sand.u32 %s315, 1
        %s726 = scalar_lea.sflag [#allocation4], %s725
        %s727 = sand.u32 %s315, 1
        %s728 = smul.addr %s727, 4
        %s729 = scalar_lea.vmem [#allocation17], %s728
        %p730 = pneg %p358
        %p731 = pneg %p355
        %s732 = sand.u32 %s44, 1
        %s733 = scalar_lea.sflag [#allocation19], %s732
        %s734 = sand.u32 %s345, 1
        %s735 = smul.addr %s734, 4
        %s736 = scalar_lea.vmem [#allocation18], %s735
        %p737 = pneg %p388
        %p738 = pneg %p385
        %s739 = sand.u32 %s44, 1
        %s740 = scalar_lea.sflag [#allocation19], %s739
        %s741 = sand.u32 %s375, 1
        %s742 = smul.addr %s741, 4
        %s743 = scalar_lea.vmem [#allocation20], %s742
        %v745 = vld [vmem:[%s589] sm:$0xff]
        %v746 = vpack.c.bf16 %v745, %v745
        %v747 = vld [vmem:[%s598] sm:$0xff]
        %v748 = vpack.c.bf16 %v747, %v747
        %v749 = vld [vmem:[%s607] sm:$0xff]
        %v750 = vpack.c.bf16 %v749, %v749
        %v751 = vld [vmem:[%s616] sm:$0xf]
        %v752 = vld [vmem:[%s616 + $0x4] sm:$0xf]
        %v753 = vld [vmem:[%s616 + $0x8] sm:$0xf]
        %v754 = vld [vmem:[%s616 + $0xc] sm:$0xf]
        %v755 = vld [vmem:[%s624] sm:$0x1]
        %v757 = vlaneseq
        %v758 = vshrl.u32 %v757, 7
        %v759 = vsub.s32 0, %v758
        %v760 = vrot.slane %v755, %v759
        %v766 = vunpack.c.l.b16 %v751
        %v767 = vunpack.c.l.b16 %v752
        %v768 = vunpack.c.l.b16 %v753
        %v769 = vunpack.c.l.b16 %v754
        %v770 = vpack.c.b16 %v767, %v766
        %v771 = vpack.c.b16 %v769, %v768
        %vm774 = vcmask 261120
        %v776 = vsel %vm774, %v746, 0
        %778 = vmatprep.subr.bf16.mxu0 0
        %779 = vmatpush1.bf16.msra.mxu0 %v770
        %780 = vmatprep.subr.bf16.mxu0 0
        %781 = vmatpush1.bf16.msra.mxu0 %v771
        %782 = vmatprep.subr.bf16.mxu0 0
        %783 = vmatpush1.bf16.msra.mxu0 0
        %784 = vmatprep.subr.bf16.mxu0 0
        %785 = vmatpush1.bf16.msra.mxu0 0
        %786 = vmatprep.subr.bf16.mxu0 0
        %787 = vmatpush1.bf16.msra.mxu0 0
        %788 = vmatprep.subr.bf16.mxu0 0
        %789 = vmatpush1.bf16.msra.mxu0 0
        %790 = vmatprep.subr.bf16.mxu0 0
        %791 = vmatpush1.bf16.msra.mxu0 0
        %792 = vmatprep.subr.bf16.mxu0 0
        %793 = vmatpush1.bf16.msra.mxu0 0
        %794 = vmatprep.subr.bf16.mxu0 0
        %795 = vmatpush1.bf16.msra.mxu0 0
        %796 = vmatprep.subr.bf16.mxu0 0
        %797 = vmatpush1.bf16.msra.mxu0 0
        %798 = vmatprep.subr.bf16.mxu0 0
        %799 = vmatpush1.bf16.msra.mxu0 0
        %800 = vmatprep.subr.bf16.mxu0 0
        %801 = vmatpush1.bf16.msra.mxu0 0
        %802 = vmatprep.subr.bf16.mxu0 0
        %803 = vmatpush1.bf16.msra.mxu0 0
        %804 = vmatprep.subr.bf16.mxu0 0
        %805 = vmatpush1.bf16.msra.mxu0 0
        %806 = vmatprep.subr.bf16.mxu0 0
        %807 = vmatpush1.bf16.msra.mxu0 0
        %808 = vmatprep.subr.bf16.mxu0 0
        %809 = vmatpush1.bf16.msra.mxu0 0
        %810 = vmatprep.mubr.bf16.mxu0 0
        %811 = vmatmul.mubr.bf16.gmra.mrb[0].mxu0 %v776
        %v812 = vpop.f32.mrb[0].mxu0
        %v813 = vadd.f32 %v760, %v812
        %v814 = vpop.f32.mrb[0].mxu0
        %v815 = vpop.f32.mrb[0].mxu0
        %v816 = vpop.f32.mrb[0].mxu0
        %817 = vdwg.mxu0
        %v818 = vld [vmem:[%s633] sm:$0xf]
        %v819 = vld [vmem:[%s633 + $0x4] sm:$0xf]
        %v820 = vld [vmem:[%s633 + $0x8] sm:$0xf]
        %v821 = vld [vmem:[%s633 + $0xc] sm:$0xf]
        %v822 = vld [vmem:[%s641] sm:$0x1]
        %v824 = vlaneseq
        %v825 = vshrl.u32 %v824, 7
        %v826 = vsub.s32 0, %v825
        %v827 = vrot.slane %v822, %v826
        %v833 = vunpack.c.l.b16 %v818
        %v834 = vunpack.c.l.b16 %v819
        %v835 = vunpack.c.l.b16 %v820
        %v836 = vunpack.c.l.b16 %v821
        %v837 = vpack.c.b16 %v834, %v833
        %v838 = vpack.c.b16 %v836, %v835
        %v842 = vsel %vm774, %v748, 0
        %844 = vmatprep.subr.bf16.mxu0 0
        %845 = vmatpush1.bf16.msra.mxu0 %v837
        %846 = vmatprep.subr.bf16.mxu0 0
        %847 = vmatpush1.bf16.msra.mxu0 %v838
        %848 = vmatprep.subr.bf16.mxu0 0
        %849 = vmatpush1.bf16.msra.mxu0 0
        %850 = vmatprep.subr.bf16.mxu0 0
        %851 = vmatpush1.bf16.msra.mxu0 0
        %852 = vmatprep.subr.bf16.mxu0 0
        %853 = vmatpush1.bf16.msra.mxu0 0
        %854 = vmatprep.subr.bf16.mxu0 0
        %855 = vmatpush1.bf16.msra.mxu0 0
        %856 = vmatprep.subr.bf16.mxu0 0
        %857 = vmatpush1.bf16.msra.mxu0 0
        %858 = vmatprep.subr.bf16.mxu0 0
        %859 = vmatpush1.bf16.msra.mxu0 0
        %860 = vmatprep.subr.bf16.mxu0 0
        %861 = vmatpush1.bf16.msra.mxu0 0
        %862 = vmatprep.subr.bf16.mxu0 0
        %863 = vmatpush1.bf16.msra.mxu0 0
        %864 = vmatprep.subr.bf16.mxu0 0
        %865 = vmatpush1.bf16.msra.mxu0 0
        %866 = vmatprep.subr.bf16.mxu0 0
        %867 = vmatpush1.bf16.msra.mxu0 0
        %868 = vmatprep.subr.bf16.mxu0 0
        %869 = vmatpush1.bf16.msra.mxu0 0
        %870 = vmatprep.subr.bf16.mxu0 0
        %871 = vmatpush1.bf16.msra.mxu0 0
        %872 = vmatprep.subr.bf16.mxu0 0
        %873 = vmatpush1.bf16.msra.mxu0 0
        %874 = vmatprep.subr.bf16.mxu0 0
        %875 = vmatpush1.bf16.msra.mxu0 0
        %876 = vmatprep.mubr.bf16.mxu0 0
        %877 = vmatmul.mubr.bf16.gmra.mrb[0].mxu0 %v842
        %v878 = vpop.f32.mrb[0].mxu0
        %v879 = vadd.f32 %v827, %v878
        %v880 = vpop.f32.mrb[0].mxu0
        %v881 = vpop.f32.mrb[0].mxu0
        %v882 = vpop.f32.mrb[0].mxu0
        %883 = vdwg.mxu0
        %v884 = vld [vmem:[%s650] sm:$0xf]
        %v885 = vld [vmem:[%s650 + $0x4] sm:$0xf]
        %v886 = vld [vmem:[%s650 + $0x8] sm:$0xf]
        %v887 = vld [vmem:[%s650 + $0xc] sm:$0xf]
        %v888 = vld [vmem:[%s658] sm:$0x1]
        %v890 = vlaneseq
        %v891 = vshrl.u32 %v890, 7
        %v892 = vsub.s32 0, %v891
        %v893 = vrot.slane %v888, %v892
        %v899 = vunpack.c.l.b16 %v884
        %v900 = vunpack.c.l.b16 %v885
        %v901 = vunpack.c.l.b16 %v886
        %v902 = vunpack.c.l.b16 %v887
        %v903 = vpack.c.b16 %v900, %v899
        %v904 = vpack.c.b16 %v902, %v901
        %v908 = vsel %vm774, %v750, 0
        %910 = vmatprep.subr.bf16.mxu0 0
        %911 = vmatpush1.bf16.msra.mxu0 %v903
        %912 = vmatprep.subr.bf16.mxu0 0
        %913 = vmatpush1.bf16.msra.mxu0 %v904
        %914 = vmatprep.subr.bf16.mxu0 0
        %915 = vmatpush1.bf16.msra.mxu0 0
        %916 = vmatprep.subr.bf16.mxu0 0
        %917 = vmatpush1.bf16.msra.mxu0 0
        %918 = vmatprep.subr.bf16.mxu0 0
        %919 = vmatpush1.bf16.msra.mxu0 0
        %920 = vmatprep.subr.bf16.mxu0 0
        %921 = vmatpush1.bf16.msra.mxu0 0
        %922 = vmatprep.subr.bf16.mxu0 0
        %923 = vmatpush1.bf16.msra.mxu0 0
        %924 = vmatprep.subr.bf16.mxu0 0
        %925 = vmatpush1.bf16.msra.mxu0 0
        %926 = vmatprep.subr.bf16.mxu0 0
        %927 = vmatpush1.bf16.msra.mxu0 0
        %928 = vmatprep.subr.bf16.mxu0 0
        %929 = vmatpush1.bf16.msra.mxu0 0
        %930 = vmatprep.subr.bf16.mxu0 0
        %931 = vmatpush1.bf16.msra.mxu0 0
        %932 = vmatprep.subr.bf16.mxu0 0
        %933 = vmatpush1.bf16.msra.mxu0 0
        %934 = vmatprep.subr.bf16.mxu0 0
        %935 = vmatpush1.bf16.msra.mxu0 0
        %936 = vmatprep.subr.bf16.mxu0 0
        %937 = vmatpush1.bf16.msra.mxu0 0
        %938 = vmatprep.subr.bf16.mxu0 0
        %939 = vmatpush1.bf16.msra.mxu0 0
        %940 = vmatprep.subr.bf16.mxu0 0
        %941 = vmatpush1.bf16.msra.mxu0 0
        %942 = vmatprep.mubr.bf16.mxu0 0
        %943 = vmatmul.mubr.bf16.gmra.mrb[0].mxu0 %v908
        %v944 = vpop.f32.mrb[0].mxu0
        %v945 = vadd.f32 %v893, %v944
        %v946 = vpop.f32.mrb[0].mxu0
        %v947 = vpop.f32.mrb[0].mxu0
        %v948 = vpop.f32.mrb[0].mxu0
        %949 = vdwg.mxu0
        %v950 = vpack.c.bf16 %v813, %v813
        %vm951 = vcmask 60416
        %952 = vst.msk [vmem:[%s729] sm:$0xf] %vm951, %v950
        %v953 = vpack.c.bf16 %v879, %v879
        %954 = vst.msk [vmem:[%s736] sm:$0xf] %vm951, %v953
        %v955 = vpack.c.bf16 %v945, %v945
        %956 = vst.msk [vmem:[%s743] sm:$0xf] %vm951, %v955
        %s957 = sand.u32 %s315, 1
        %s958 = scalar_lea.sflag [#allocation4], %s957
        %s959 = sand.u32 %s315, 1
        %s960 = smul.addr %s959, 4
        %s961 = scalar_lea.vmem [#allocation17], %s960
        %s962 = sand.u32 %s44, 1
        %s963 = scalar_lea.sflag [#allocation19], %s962
        %s964 = sand.u32 %s345, 1
        %s965 = smul.addr %s964, 4
        %s966 = scalar_lea.vmem [#allocation18], %s965
        %s967 = sand.u32 %s44, 1
        %s968 = scalar_lea.sflag [#allocation19], %s967
        %s969 = sand.u32 %s375, 1
        %s970 = smul.addr %s969, 4
        %s971 = scalar_lea.vmem [#allocation20], %s970
        // Predicated region
        $region93: #{tpu_custom_call.1} parent=55 // pred_check
          %p972 = pneg %p325
        $region94: #{tpu_custom_call.1} parent=55 // pred_check_branch
          %974 = sbr.rel (%p972) target = $region96
        $region95: #{tpu_custom_call.1} parent=55 // pred_region
          %s976 = ssub.s32 64, 64
          %977 = vsyncadd %s958, %s976
          %s978 = sadd.s32 %s50, %s51
          %s979 = smul.addr %s49, 4
          %s980 = sadd.s32 %s978, %s979
          %s981 = smul.addr %s980, 64
          %s982 = scalar_lea.hbm %s9, %s981
          %s984 = sshll.u32 %s961, 4
          %s985 = int_to_ptr.vmem [resolvable:$true] %s984
          %987 = dma.vmem_to_hbm [thread:$0]  %s985, 64, %s982, %s958
        $region96: #{tpu_custom_call.1} parent=55 // pred_fallthru
          _
        // Predicated region
        $region97: #{tpu_custom_call.1} parent=55 // pred_check
          %p988 = pneg %p355
        $region98: #{tpu_custom_call.1} parent=55 // pred_check_branch
          %990 = sbr.rel (%p988) target = $region100
        $region99: #{tpu_custom_call.1} parent=55 // pred_region
          %s992 = ssub.s32 64, 64
          %993 = vsyncadd %s963, %s992
          %s994 = sadd.s32 %s50, %s51
          %s995 = smul.addr %s49, 4
          %s996 = sadd.s32 %s994, %s995
          %s997 = smul.addr %s996, 64
          %s998 = scalar_lea.hbm %s10, %s997
          %s1000 = sshll.u32 %s966, 4
          %s1001 = int_to_ptr.vmem [resolvable:$true] %s1000
          %1003 = dma.vmem_to_hbm [thread:$0]  %s1001, 64, %s998, %s963
        $region100: #{tpu_custom_call.1} parent=55 // pred_fallthru
          _
        // Predicated region
        $region101: #{tpu_custom_call.1} parent=55 // pred_check
          %p1004 = pneg %p385
        $region102: #{tpu_custom_call.1} parent=55 // pred_check_branch
          %1006 = sbr.rel (%p1004) target = $region104
        $region103: #{tpu_custom_call.1} parent=55 // pred_region
          %s1008 = ssub.s32 64, 64
          %1009 = vsyncadd %s968, %s1008
          %s1010 = sadd.s32 %s50, %s51
          %s1011 = smul.addr %s49, 4
          %s1012 = sadd.s32 %s1010, %s1011
          %s1013 = smul.addr %s1012, 64
          %s1014 = scalar_lea.hbm %s11, %s1013
          %s1016 = sshll.u32 %s971, 4
          %s1017 = int_to_ptr.vmem [resolvable:$true] %s1016
          %1019 = dma.vmem_to_hbm [thread:$0]  %s1017, 64, %s1014, %s968
        $region104: #{tpu_custom_call.1} parent=55 // pred_fallthru
          _
      $region56: #{tpu_custom_call.1} parent=5 // pred_fallthru
        _
      %p1020 = scmp.le.s32.totalorder 2, %s39
      // Predicated region
      $region105: #{tpu_custom_call.1} parent=5 // pred_check
        %p1021 = pneg %p1020
      $region106: #{tpu_custom_call.1} parent=5 // pred_check_branch
        %1023 = sbr.rel (%p1021) target = $region108
      $region107: #{tpu_custom_call.1} parent=5 // pred_region
        %s1024 = ssub.s32 %s39, 2
        // Predicated region
        $region109: #{tpu_custom_call.1} parent=107 // pred_check
          %p1025 = pneg %p331
        $region110: #{tpu_custom_call.1} parent=107 // pred_check_branch
          %1027 = sbr.rel (%p1025) target = $region112
        $region111: #{tpu_custom_call.1} parent=107 // pred_region
          %s1028 = sand.u32 %s316, 1
          %s1029 = scalar_lea.sflag [#allocation4], %s1028
          %s1030 = sand.u32 %s316, 1
          %s1031 = smul.addr %s1030, 4
          %s1032 = scalar_lea.vmem [#allocation17], %s1031
          %1033 = dma.done %s1029, 64
        $region112: #{tpu_custom_call.1} parent=107 // pred_fallthru
          _
        // Predicated region
        $region113: #{tpu_custom_call.1} parent=107 // pred_check
          %p1034 = pneg %p361
        $region114: #{tpu_custom_call.1} parent=107 // pred_check_branch
          %1036 = sbr.rel (%p1034) target = $region116
        $region115: #{tpu_custom_call.1} parent=107 // pred_region
          %s1037 = sand.u32 %s45, 1
          %s1038 = scalar_lea.sflag [#allocation19], %s1037
          %s1039 = sand.u32 %s346, 1
          %s1040 = smul.addr %s1039, 4
          %s1041 = scalar_lea.vmem [#allocation18], %s1040
          %1042 = dma.done %s1038, 64
        $region116: #{tpu_custom_call.1} parent=107 // pred_fallthru
          _
        // Predicated region
        $region117: #{tpu_custom_call.1} parent=107 // pred_check
          %p1043 = pneg %p391
        $region118: #{tpu_custom_call.1} parent=107 // pred_check_branch
          %1045 = sbr.rel (%p1043) target = $region120
        $region119: #{tpu_custom_call.1} parent=107 // pred_region
          %s1046 = sand.u32 %s45, 1
          %s1047 = scalar_lea.sflag [#allocation19], %s1046
          %s1048 = sand.u32 %s376, 1
          %s1049 = smul.addr %s1048, 4
          %s1050 = scalar_lea.vmem [#allocation20], %s1049
          %1051 = dma.done %s1047, 64
        $region120: #{tpu_custom_call.1} parent=107 // pred_fallthru
          _
      $region108: #{tpu_custom_call.1} parent=5 // pred_fallthru
        _
    $region6: #{tpu_custom_call.1} parent=1 // loop_footer
      %s43 = sadd.s32 1, %s39
    $region7: #{tpu_custom_call.1} parent=1 // loop_footer_branch
      %38 = sbr.rel target = $region3
    $region8: #{tpu_custom_call.1} parent=1 // loop_exit
      _
    %1052 = vsyncpa [#allocation3], 1
    %s1053 = scalar_lea.sflag [#allocation3], 1
    %1054 = vsyncpa %s1053, 1
    %1055 = vsyncpa [#allocation6], 1
    %s1056 = scalar_lea.sflag [#allocation6], 1
    %1057 = vsyncpa %s1056, 1
    %1058 = vsyncpa [#allocation9], 1
    %s1059 = scalar_lea.sflag [#allocation9], 1
    %1060 = vsyncpa %s1059, 1
    %1061 = vsyncpa [#allocation12], 1
    %s1062 = scalar_lea.sflag [#allocation12], 1
    %1063 = vsyncpa %s1062, 1
    %1064 = vsyncpa [#allocation15], 1
    %s1065 = scalar_lea.sflag [#allocation15], 1
    %1066 = vsyncpa %s1065, 1
    %1067 = vsyncpa [#allocation4], 1
    %s1068 = scalar_lea.sflag [#allocation4], 1
    %1069 = vsyncpa %s1068, 1
    %1070 = vsyncpa [#allocation19], 1
    %s1071 = scalar_lea.sflag [#allocation19], 1
    %1072 = vsyncpa %s1071, 1

</llo_original>
